<compile_context>
chip_gen: v7x
topology: tpu7x:2x2x1
jax: 0.10.0
libtpu: 0.0.40
codegen_flags: <defaults>
</compile_context>

<pallas_src>
import math

import jax
import jax.numpy as jnp
from jax.experimental import pallas as pl
from jax.experimental.pallas import tpu as pltpu


def _choose_tile(dim, target, align):
    """Largest tile <= target that is a multiple of `align` and divides `dim`.

    Falls back to the full dim (always a legal BlockSpec block) when no such
    tile exists or when the dim is already small.
    """
    if dim <= target:
        return dim
    t = (target // align) * align
    while t >= align:
        if dim % t == 0:
            return t
        t -= align
    return dim


# ----------------------------- kernels --------------------------------------


def _xw_kernel(x_ref, w_ref, o_ref):
    # support tile = x_tile @ W_tile.  K (= f_in) is kept whole because it is
    # small; this kernel is memory-bound on streaming x, so rows are tiled big.
    o_ref[...] = jnp.dot(
        x_ref[...], w_ref[...], preferred_element_type=jnp.float32
    ).astype(o_ref.dtype)


def _adj_bias_kernel(adj_ref, s_ref, b_ref, o_ref, acc_ref):
    # output tile = sum_k adj[i,k] @ support[k,j]  (+ bias at finalize)
    k = pl.program_id(2)

    @pl.when(k == 0)
    def _init():
        acc_ref[...] = jnp.zeros_like(acc_ref)

    acc_ref[...] += jnp.dot(
        adj_ref[...], s_ref[...], preferred_element_type=jnp.float32
    )

    @pl.when(k == pl.num_programs(2) - 1)
    def _store():
        # bias add rides the VPU under the MXU-bound matmul (finalize only).
        o_ref[...] = (acc_ref[...] + b_ref[...]).astype(o_ref.dtype)


def _adj_kernel(adj_ref, s_ref, o_ref, acc_ref):
    k = pl.program_id(2)

    @pl.when(k == 0)
    def _init():
        acc_ref[...] = jnp.zeros_like(acc_ref)

    acc_ref[...] += jnp.dot(
        adj_ref[...], s_ref[...], preferred_element_type=jnp.float32
    )

    @pl.when(k == pl.num_programs(2) - 1)
    def _store():
        o_ref[...] = acc_ref[...].astype(o_ref.dtype)


# ----------------------------- wrapper ---------------------------------------


def gcn_conv(x, adj, weight, bias=None, *, tm=256, tn=512, tk=512,
             tm_x=512, tn_x=512):
    """Pallas implementation of GCNConv.forward(x, adj)."""
    N = x.shape[0]
    f_in = x.shape[-1]
    f_out = weight.shape[1]

    # ---- support = torch.matmul(x, W): contract over the last dim -----------
    x2d = x.reshape(-1, f_in)            # (M, F_in) glue reshape
    M = x2d.shape[0]

    bm = _choose_tile(M, tm_x, 8)        # row tile of x2d / support
    bn = _choose_tile(f_out, tn_x, 128)  # lane-dense column tile of support

    support = pl.pallas_call(
        _xw_kernel,
        out_shape=jax.ShapeDtypeStruct((M, f_out), x.dtype),
        grid_spec=pltpu.PrefetchScalarGridSpec(
            num_scalar_prefetch=0,
            grid=(M // bm, f_out // bn),
            in_specs=[
                pl.BlockSpec((bm, f_in), lambda i, j: (i, 0)),
                pl.BlockSpec((f_in, bn), lambda i, j: (0, j)),
            ],
            out_specs=pl.BlockSpec((bm, bn), lambda i, j: (i, j)),
        ),
        compiler_params=pltpu.CompilerParams(
            dimension_semantics=("parallel", "parallel")),
    )(x2d, weight)

    # ---- support.flatten(1) ; spmm(adj, support) ; + bias (fused) -----------
    S = M // N
    cols = S * f_out
    s_flat = support.reshape(N, cols)    # flatten(1) glue reshape

    btm = _choose_tile(N, tm, 8)         # output row tile (nodes)
    btn = _choose_tile(cols, tn, 128)    # lane-dense output column tile
    btk = _choose_tile(N, tk, 128)       # reduction (neighbor) tile

    grid = (N // btm, cols // btn, N // btk)
    adj_spec = pl.BlockSpec((btm, btk), lambda i, j, k: (i, k))
    sup_spec = pl.BlockSpec((btk, btn), lambda i, j, k: (k, j))
    out_spec = pl.BlockSpec((btm, btn), lambda i, j, k: (i, j))
    scratch = [pltpu.VMEM((btm, btn), jnp.float32)]
    common = dict(
        out_shape=jax.ShapeDtypeStruct((N, cols), x.dtype),
        compiler_params=pltpu.CompilerParams(
            dimension_semantics=("parallel", "parallel", "arbitrary")),
    )

    # TODO(synk): torch.spmm exploits adjacency sparsity; adj is given as a
    # dense (N, N) matrix here, so a dense tiled MXU matmul is numerically
    # identical.
    if bias is not None:
        # bias broadcasts over the last dim of x.shape after the final reshape;
        # on the flattened (N, S*f_out) layout that is bias tiled S times along
        # lanes.  The tiled row is tiny (S*f_out*4 B); only a (1, btn) slab is
        # DMA'd per column tile and the add happens once, at the finalize step.
        b_row = jnp.tile(bias.astype(x.dtype), (S,)).reshape(1, cols)
        out_flat = pl.pallas_call(
            _adj_bias_kernel,
            grid_spec=pltpu.PrefetchScalarGridSpec(
                num_scalar_prefetch=0,
                grid=grid,
                in_specs=[adj_spec, sup_spec,
                          pl.BlockSpec((1, btn), lambda i, j, k: (0, j))],
                out_specs=out_spec,
                scratch_shapes=scratch,
            ),
            **common,
        )(adj, s_flat, b_row)
    else:
        out_flat = pl.pallas_call(
            _adj_kernel,
            grid_spec=pltpu.PrefetchScalarGridSpec(
                num_scalar_prefetch=0,
                grid=grid,
                in_specs=[adj_spec, sup_spec],
                out_specs=out_spec,
                scratch_shapes=scratch,
            ),
            **common,
        )(adj, s_flat)

    # output.reshape(x.shape)  (valid because f_out == f_in, as in the module)
    return out_flat.reshape(x.shape[:-1] + (f_out,))


def init_gcn_params(key, in_features, out_features, bias=True):
    """Deterministic init matching GCNConv.reset_parameters."""
    stdv = 1.0 / math.sqrt(out_features)
    kw, kb = jax.random.split(key)
    weight = jax.random.uniform(
        kw, (in_features, out_features), jnp.float32, minval=-stdv, maxval=stdv
    )
    b = (
        jax.random.uniform(kb, (out_features,), jnp.float32, minval=-stdv, maxval=stdv)
        if bias
        else None
    )
    return weight, b


if __name__ == "__main__":
    # Small shapes: N=8 graph nodes, S=4 slots per node, in=out=32 features
    # (in_features must equal out_features for the module's reshape to x.shape).
    N, S, F = 8, 4, 32
    key = jax.random.PRNGKey(0)
    kx, kadj, kp = jax.random.split(key, 3)

    x = jax.random.normal(kx, (N, S, F), jnp.float32)

    # Deterministic "adjacency": random graph with self loops, row-normalized.
    a_raw = (jax.random.uniform(kadj, (N, N)) > 0.5).astype(jnp.float32)
    a_raw = a_raw + jnp.eye(N, dtype=jnp.float32)
    adj = a_raw / jnp.sum(a_raw, axis=1, keepdims=True)

    weight, bias = init_gcn_params(kp, F, F, bias=True)

    out = gcn_conv(x, adj, weight, bias)
    out = jax.block_until_ready(out)

    # Pure-JAX reference (mirrors the PyTorch forward exactly).
    support_ref = jnp.matmul(x, weight)
    support_ref = support_ref.reshape(N, -1)
    out_ref = jnp.matmul(adj, support_ref).reshape(x.shape) + bias

    assert out.shape == x.shape
    assert jnp.allclose(out, out_ref, atol=1e-5, rtol=1e-5)

    # Also exercise the bias=None path once.
    out_nb = jax.block_until_ready(gcn_conv(x, adj, weight, None))
    ref_nb = jnp.matmul(adj, support_ref).reshape(x.shape)
    assert jnp.allclose(out_nb, ref_nb, atol=1e-5, rtol=1e-5)

    print("KERNEL_OK")
</pallas_src>

<mosaic_0001>
module attributes {stable_mosaic.version = 11 : i64} {
  func.func @_xw_kernel(%arg0: i32, %arg1: i32, %arg2: memref<32x32xf32, #tpu.memory_space<vmem>>, %arg3: memref<32x32xf32, #tpu.memory_space<vmem>>, %arg4: memref<32x32xf32, #tpu.memory_space<vmem>>) attributes {dimension_semantics = [#tpu.dimension_semantics<parallel>, #tpu.dimension_semantics<parallel>], iteration_bounds = array<i64: 1, 1>, scalar_prefetch = 0 : i64, scratch_operands = 0 : i64, tpu.core_type = #tpu.core_type<tc>, window_params = [{transform_indices = @transform_0, window_bounds = array<i64: 32, 32>}, {transform_indices = @transform_1, window_bounds = array<i64: 32, 32>}, {transform_indices = @transform_2, window_bounds = array<i64: 32, 32>}]} {
    %c0 = arith.constant 0 : index
    %c0_0 = arith.constant 0 : index
    %0 = vector.load %arg2[%c0, %c0_0] : memref<32x32xf32, #tpu.memory_space<vmem>>, vector<32x32xf32>
    %c0_1 = arith.constant 0 : index
    %c0_2 = arith.constant 0 : index
    %1 = vector.load %arg3[%c0_1, %c0_2] : memref<32x32xf32, #tpu.memory_space<vmem>>, vector<32x32xf32>
    %cst = arith.constant dense<0.000000e+00> : vector<32x32xf32>
    %2 = tpu.matmul %0, %1, %cst {dimension_numbers = #tpu.dot_dimension_numbers<[1], [0], [0], [1], [0, 0, 1, 1], [], []>} : vector<32x32xf32>, vector<32x32xf32>, vector<32x32xf32> -> vector<32x32xf32>
    %c0_3 = arith.constant 0 : index
    %c0_4 = arith.constant 0 : index
    %3 = vector.load %arg4[%c0_3, %c0_4] : memref<32x32xf32, #tpu.memory_space<vmem>>, vector<32x32xf32>
    tpu.vector_store %arg4[%c0_3, %c0_4], %2 {strides = array<i32>} : memref<32x32xf32, #tpu.memory_space<vmem>>, vector<32x32xf32>,
    return
  }
  func.func @transform_0(%arg0: i32, %arg1: i32) -> (i32, i32) {
    %c0_i32 = arith.constant 0 : i32
    %c0_i32_0 = arith.constant 0 : i32
    return %arg0, %c0_i32 : i32, i32
  }
  func.func @transform_1(%arg0: i32, %arg1: i32) -> (i32, i32) {
    %c0_i32 = arith.constant 0 : i32
    %c0_i32_0 = arith.constant 0 : i32
    return %c0_i32, %arg1 : i32, i32
  }
  func.func @transform_2(%arg0: i32, %arg1: i32) -> (i32, i32) {
    %c0_i32 = arith.constant 0 : i32
    return %arg0, %arg1 : i32, i32
  }
}

</mosaic_0001>

<llo_original>
// kernel: tpu_custom_call.1
$region0: #{tpu_custom_call.1}
  #allocation0 [shape = 'u32[]', space=smem, size = 0x4, offset = 0x4, fixed_abs, tag = 'smem constant byte address 0x4 - core index']
  #allocation1 [shape = 'u32[144,128]{1,0:T(1,128)}', space=vmem, size = 0x12000, scoped, tag = 'internal scratch']
  %s0 = inlined_call_operand.hbm [shape: f32[32,32], index: 0, kind: input, shape index: {}]
  %s1 = inlined_call_operand.hbm [shape: f32[32,32], index: 1, kind: input, shape index: {}]
  %s2 = inlined_call_operand.hbm [shape: f32[32,32], index: 2, kind: output, shape index: {}]
  %s3 = sld [smem:[#allocation0]]
  $region26: #{tpu_custom_call.1} parent=0
    _
  %s5 = ssub.s32 1, %s3
  %s6 = scalar_select 0, %s5, %s3
  $region1: #{tpu_custom_call.1} parent=0
    #allocation2 [shape = 'u8[16384]{0}', space=vmem, size = 0x4000, scoped, tag = 'input window, operand 0, single buffered']
    #allocation3 [shape = 's32[1]{0}', space=sflag, size = 0x4, scoped, tag = 'scoped memory for tpu_custom_call.1']
    #allocation4 [shape = 's32[1]{0}', space=sflag, size = 0x4, scoped, tag = 'scoped memory for tpu_custom_call.1']
    #allocation5 [shape = 'u8[16384]{0}', space=vmem, size = 0x4000, scoped, tag = 'input window, operand 1, single buffered']
    #allocation6 [shape = 's32[1]{0}', space=sflag, size = 0x4, scoped, tag = 'scoped memory for tpu_custom_call.1']
    #allocation7 [shape = 'u8[16384]{0}', space=vmem, size = 0x4000, scoped, tag = 'output window, operand 0, single buffered']
    %7 = vsyncpa [#allocation3], 0
    %8 = vsyncpa [#allocation6], 0
    %9 = vsyncpa [#allocation4], 0
    // Predicated region
    $region2: #{tpu_custom_call.1} parent=1 // pred_check
      _
    $region3: #{tpu_custom_call.1} parent=1 // pred_check_branch
      %11 = sbr.rel (0) target = $region5
    $region4: #{tpu_custom_call.1} parent=1 // pred_region
      %s13 = ssub.s32 512, 512
      %14 = vsyncadd [#allocation3], %s13
      %s15 = sshll.u32 [#allocation2], 4
      %s16 = int_to_ptr.vmem [resolvable:$true] %s15
      %21 = dma.hbm_to_vmem [thread:$0]  %s0, 512, %s16, [#allocation3], 128, 128, 8
    $region5: #{tpu_custom_call.1} parent=1 // pred_fallthru
      _
    // Predicated region
    $region6: #{tpu_custom_call.1} parent=1 // pred_check
      _
    $region7: #{tpu_custom_call.1} parent=1 // pred_check_branch
      %23 = sbr.rel (0) target = $region9
    $region8: #{tpu_custom_call.1} parent=1 // pred_region
      %s25 = ssub.s32 512, 512
      %26 = vsyncadd [#allocation6], %s25
      %s27 = sshll.u32 [#allocation5], 4
      %s28 = int_to_ptr.vmem [resolvable:$true] %s27
      %33 = dma.hbm_to_vmem [thread:$0]  %s1, 512, %s28, [#allocation6], 128, 128, 8
    $region9: #{tpu_custom_call.1} parent=1 // pred_fallthru
      _
    // Predicated region
    $region10: #{tpu_custom_call.1} parent=1 // pred_check
      _
    $region11: #{tpu_custom_call.1} parent=1 // pred_check_branch
      %35 = sbr.rel (0) target = $region13
    $region12: #{tpu_custom_call.1} parent=1 // pred_region
      %36 = dma.done [#allocation3], 512
    $region13: #{tpu_custom_call.1} parent=1 // pred_fallthru
      _
    // Predicated region
    $region14: #{tpu_custom_call.1} parent=1 // pred_check
      _
    $region15: #{tpu_custom_call.1} parent=1 // pred_check_branch
      %38 = sbr.rel (0) target = $region17
    $region16: #{tpu_custom_call.1} parent=1 // pred_region
      %39 = dma.done [#allocation6], 512
    $region17: #{tpu_custom_call.1} parent=1 // pred_fallthru
      _
    %v40 = vld [vmem:[#allocation2] sm:$0xff]
    %v41 = vld [vmem:[#allocation2 + $0x8] sm:$0xff]
    %v42 = vld [vmem:[#allocation2 + $0x10] sm:$0xff]
    %v43 = vld [vmem:[#allocation2 + $0x18] sm:$0xff]
    %v44 = vld [vmem:[#allocation5] sm:$0xff]
    %v45 = vld [vmem:[#allocation5 + $0x8] sm:$0xff]
    %v46 = vld [vmem:[#allocation5 + $0x10] sm:$0xff]
    %v47 = vld [vmem:[#allocation5 + $0x18] sm:$0xff]
    %vm48 = vcmask 261120
    %v50 = vsel %vm48, %v40, 0
    %v53 = vsel %vm48, %v41, 0
    %v56 = vsel %vm48, %v42, 0
    %v59 = vsel %vm48, %v43, 0
    %61 = vmatprep.subr.mxu0 0.0
    %62 = vmatpush1.msra.mxu0 %v44
    %63 = vmatprep.subr.mxu0 0.0
    %64 = vmatpush1.msra.mxu0 %v45
    %65 = vmatprep.subr.mxu0 0.0
    %66 = vmatpush1.msra.mxu0 %v46
    %67 = vmatprep.subr.mxu0 0.0
    %68 = vmatpush1.msra.mxu0 %v47
    %69 = vmatprep.subr.mxu0 0.0
    %70 = vmatpush1.msra.mxu0 0.0
    %71 = vmatprep.subr.mxu0 0.0
    %72 = vmatpush1.msra.mxu0 0.0
    %73 = vmatprep.subr.mxu0 0.0
    %74 = vmatpush1.msra.mxu0 0.0
    %75 = vmatprep.subr.mxu0 0.0
    %76 = vmatpush1.msra.mxu0 0.0
    %77 = vmatprep.subr.mxu0 0.0
    %78 = vmatpush1.msra.mxu0 0.0
    %79 = vmatprep.subr.mxu0 0.0
    %80 = vmatpush1.msra.mxu0 0.0
    %81 = vmatprep.subr.mxu0 0.0
    %82 = vmatpush1.msra.mxu0 0.0
    %83 = vmatprep.subr.mxu0 0.0
    %84 = vmatpush1.msra.mxu0 0.0
    %85 = vmatprep.subr.mxu0 0.0
    %86 = vmatpush1.msra.mxu0 0.0
    %87 = vmatprep.subr.mxu0 0.0
    %88 = vmatpush1.msra.mxu0 0.0
    %89 = vmatprep.subr.mxu0 0.0
    %90 = vmatpush1.msra.mxu0 0.0
    %91 = vmatprep.subr.mxu0 0.0
    %92 = vmatpush1.msra.mxu0 0.0
    %93 = vmatprep.subr.mxu0 0.0
    %94 = vmatpush1.msra.mxu0 0.0
    %95 = vmatprep.subr.mxu0 0.0
    %96 = vmatpush1.msra.mxu0 0.0
    %97 = vmatprep.subr.mxu0 0.0
    %98 = vmatpush1.msra.mxu0 0.0
    %99 = vmatprep.subr.mxu0 0.0
    %100 = vmatpush1.msra.mxu0 0.0
    %101 = vmatprep.subr.mxu0 0.0
    %102 = vmatpush1.msra.mxu0 0.0
    %103 = vmatprep.subr.mxu0 0.0
    %104 = vmatpush1.msra.mxu0 0.0
    %105 = vmatprep.subr.mxu0 0.0
    %106 = vmatpush1.msra.mxu0 0.0
    %107 = vmatprep.subr.mxu0 0.0
    %108 = vmatpush1.msra.mxu0 0.0
    %109 = vmatprep.subr.mxu0 0.0
    %110 = vmatpush1.msra.mxu0 0.0
    %111 = vmatprep.subr.mxu0 0.0
    %112 = vmatpush1.msra.mxu0 0.0
    %113 = vmatprep.subr.mxu0 0.0
    %114 = vmatpush1.msra.mxu0 0.0
    %115 = vmatprep.subr.mxu0 0.0
    %116 = vmatpush1.msra.mxu0 0.0
    %117 = vmatprep.subr.mxu0 0.0
    %118 = vmatpush1.msra.mxu0 0.0
    %119 = vmatprep.subr.mxu0 0.0
    %120 = vmatpush1.msra.mxu0 0.0
    %121 = vmatprep.subr.mxu0 0.0
    %122 = vmatpush1.msra.mxu0 0.0
    %123 = vmatprep.subr.mxu0 0.0
    %124 = vmatpush1.msra.mxu0 0.0
    %125 = vmatprep.mubr.f32.mxu0 0.0
    %126 = vmatmul.mubr.f32.gmra.mrb[0].mxu0 %v50
    %v127 = vpop.f32.mrb[0].mxu0
    %v128 = vadd.f32 0.0, %v127
    %v129 = vpop.f32.mrb[0].mxu0
    %130 = vmatprep.mubr.f32.mxu0 0.0
    %131 = vmatmul.mubr.f32.gmra.mrb[0].mxu0 %v53
    %v132 = vpop.f32.mrb[0].mxu0
    %v133 = vadd.f32 0.0, %v132
    %v134 = vpop.f32.mrb[0].mxu0
    %135 = vmatprep.mubr.f32.mxu0 0.0
    %136 = vmatmul.mubr.f32.gmra.mrb[0].mxu0 %v56
    %v137 = vpop.f32.mrb[0].mxu0
    %v138 = vadd.f32 0.0, %v137
    %v139 = vpop.f32.mrb[0].mxu0
    %140 = vmatprep.mubr.f32.mxu0 0.0
    %141 = vmatmul.mubr.f32.gmra.mrb[0].mxu0 %v59
    %v142 = vpop.f32.mrb[0].mxu0
    %v143 = vadd.f32 0.0, %v142
    %v144 = vpop.f32.mrb[0].mxu0
    %145 = vdwg.mxu0
    %146 = vst.msk [vmem:[#allocation7] sm:$0xff] %vm48, %v128
    %147 = vst.msk [vmem:[#allocation7 + $0x8] sm:$0xff] %vm48, %v133
    %148 = vst.msk [vmem:[#allocation7 + $0x10] sm:$0xff] %vm48, %v138
    %149 = vst.msk [vmem:[#allocation7 + $0x18] sm:$0xff] %vm48, %v143
    // Predicated region
    $region18: #{tpu_custom_call.1} parent=1 // pred_check
      _
    $region19: #{tpu_custom_call.1} parent=1 // pred_check_branch
      %151 = sbr.rel (0) target = $region21
    $region20: #{tpu_custom_call.1} parent=1 // pred_region
      %s153 = ssub.s32 512, 512
      %154 = vsyncadd [#allocation4], %s153
      %s155 = sshll.u32 [#allocation7], 4
      %s156 = int_to_ptr.vmem [resolvable:$true] %s155
      %161 = dma.vmem_to_hbm [thread:$0]  %s156, 512, %s2, [#allocation4], 128, 128, 8
    $region21: #{tpu_custom_call.1} parent=1 // pred_fallthru
      _
    // Predicated region
    $region22: #{tpu_custom_call.1} parent=1 // pred_check
      _
    $region23: #{tpu_custom_call.1} parent=1 // pred_check_branch
      %163 = sbr.rel (0) target = $region25
    $region24: #{tpu_custom_call.1} parent=1 // pred_region
      %164 = dma.done [#allocation4], 512
    $region25: #{tpu_custom_call.1} parent=1 // pred_fallthru
      _
    %165 = vsyncpa [#allocation3], 1
    %166 = vsyncpa [#allocation6], 1
    %167 = vsyncpa [#allocation4], 1

</llo_original>
